<compile_context>
chip_gen: v5e
topology: v5e:2x2
jax: 0.10.0
libtpu: 0.0.40
codegen_flags: <defaults>
</compile_context>

<pallas_src>
import functools

import jax
import jax.numpy as jnp
from jax import lax
from jax.experimental import pallas as pl
from jax.experimental.pallas import tpu as pltpu

block_size = 16
n_embd = 256

NEG_INF = -1e30  # large finite negative instead of -inf (same softmax result, safer arith)


def _head_kernel(x_ref, wqkv_ref, o_ref, *, head_size):
    Bt, T, C = x_ref.shape
    H = head_size

    # Fused QKV projection on the MXU: (Bt*T, C) @ (C, 3H), f32 accumulation.
    # (Leading-dim reshape only: no relayout.)
    x2d = x_ref[...].reshape(Bt * T, C)
    qkv = jnp.dot(x2d, wqkv_ref[...], preferred_element_type=jnp.float32)
    qkv = qkv.reshape(Bt, T, 3 * H)

    # NOTE: lane slices at offsets 0/H/2H of the 3H-wide rows lower to XLU lane
    # shifts; negligible at T=16, H=32, but audit the bundle dump if the block
    # grows (restructure into separate Q and K|V dots if XLU hits the crit path).
    q = qkv[:, :, 0:H]           # W_q was pre-scaled by head_size**-0.5 in the wrapper
    k = qkv[:, :, H:2 * H]
    v = qkv[:, :, 2 * H:3 * H]

    # Attention scores: contract the head dim directly (no explicit k transpose).
    s = jnp.einsum('btd,bsd->bts', q, k, preferred_element_type=jnp.float32)  # (Bt, T, T)

    # Causal mask built in-kernel: two iota+compare ops on a (T, T) tile (free on VPU),
    # avoids a whole input array / BlockSpec / DMA.
    row = lax.broadcasted_iota(jnp.int32, (T, T), 0)
    col = lax.broadcasted_iota(jnp.int32, (T, T), 1)
    s = jnp.where((col <= row)[None, :, :], s, NEG_INF)

    # Numerically-stable softmax in f32; exact division (EUP is nowhere near the
    # binding slot at this size, so the approx reciprocal bought nothing).
    s = s - jnp.max(s, axis=-1, keepdims=True)
    p = jnp.exp(s)
    p = p / jnp.sum(p, axis=-1, keepdims=True)

    # (eval-mode: dropout on `p` is the identity)

    out = jnp.einsum('bts,bsd->btd', p, v, preferred_element_type=jnp.float32)  # (Bt, T, H)

    # Direct (Bt, T, H) store: the output is ~2 KB per step; a masked vst is cheaper
    # than an in-kernel relayout across the (8,128) tile boundary.
    o_ref[...] = out.astype(o_ref.dtype)


def head_forward(x, wk, wq, wv, *, batch_tile=None, compute_dtype=jnp.bfloat16):
    """Eval-mode Head.forward.

    x: (B, T, C); wk/wq/wv: (C, H). Returns (B, T, H) in x.dtype.
    compute_dtype controls the MXU-operand dtype for the QKV projection only
    (default bf16 halves HBM->VMEM bytes; MXU is bf16-native on v5e/v6e/v7x).
    Softmax / masking / accumulation are always f32. Use jnp.float32 for exact
    parity with the f32 PyTorch module.
    """
    B, T, C = x.shape
    H = wk.shape[1]
    out_dtype = x.dtype

    # Fold the 1/sqrt(H) scale into W_q, fuse Q|K|V into one (C, 3H) matrix, and cast
    # the MXU operands in the wrapper (halves DMA bytes when compute_dtype is bf16).
    wqkv = jnp.concatenate([wq * (H ** -0.5), wk, wv], axis=1).astype(compute_dtype)
    x_in = x.astype(compute_dtype)

    # Batch tile: target >=256 projection rows per grid step (MXU M on v6e/v7x; v5e
    # needs >=128) while minimizing the number of grid steps. For B=2, T=16 this
    # yields bt=B -> grid=(1,). VMEM is not a constraint here (<5 MB live even at
    # bt=128 vs 64 MiB on v7x / 128 MiB on v5e/v6e), so no artificial cap.
    if batch_tile is None:
        desired = min(B, pl.cdiv(256, T))
        bt = next(d for d in range(desired, B + 1) if B % d == 0)
    else:
        bt = batch_tile
    assert B % bt == 0, "batch_tile must divide B"

    kernel = functools.partial(_head_kernel, head_size=H)

    out = pl.pallas_call(
        kernel,
        out_shape=jax.ShapeDtypeStruct((B, T, H), out_dtype),
        grid_spec=pltpu.PrefetchScalarGridSpec(
            num_scalar_prefetch=0,
            grid=(B // bt,),
            in_specs=[
                pl.BlockSpec((bt, T, C), lambda b: (b, 0, 0)),
                # Constant index_map: weights stay VMEM-resident across grid steps.
                pl.BlockSpec((C, 3 * H), lambda b: (0, 0)),
            ],
            out_specs=pl.BlockSpec((bt, T, H), lambda b: (b, 0, 0)),
        ),
        compiler_params=pltpu.CompilerParams(
            dimension_semantics=("parallel",)),
    )(x_in, wqkv)

    return out


def reference_forward(x, wk, wq, wv):
    k = x @ wk
    q = x @ wq
    v = x @ wv
    wei = (q @ jnp.swapaxes(k, -2, -1)) * (k.shape[-1] ** -0.5)
    T = x.shape[1]
    tril = jnp.tril(jnp.ones((T, T)))
    wei = jnp.where(tril == 0, -jnp.inf, wei)
    wei = jax.nn.softmax(wei, axis=-1)
    return wei @ v


if __name__ == "__main__":
    B = 2
    T = block_size       # 16
    C = n_embd           # 256
    head_size = 32

    key = jax.random.PRNGKey(0)
    kx, kk, kq, kv = jax.random.split(key, 4)

    x = jax.random.normal(kx, (B, T, C), dtype=jnp.float32)
    # deterministic parameter init (roughly matches nn.Linear's U(-1/sqrt(C), 1/sqrt(C)))
    bound = 1.0 / (C ** 0.5)
    wk = jax.random.uniform(kk, (C, head_size), jnp.float32, -bound, bound)
    wq = jax.random.uniform(kq, (C, head_size), jnp.float32, -bound, bound)
    wv = jax.random.uniform(kv, (C, head_size), jnp.float32, -bound, bound)

    ref = reference_forward(x, wk, wq, wv)

    # f32-projection path: parity with the f32 PyTorch module (exact softmax divide).
    out_f32 = jax.block_until_ready(
        head_forward(x, wk, wq, wv, compute_dtype=jnp.float32))
    assert out_f32.shape == (B, T, head_size)
    assert jnp.allclose(out_f32, ref, atol=2e-3, rtol=2e-3), "f32 path mismatch vs reference"

    # Default bf16-projection path: halved DMA bytes; bf16 MXU operands -> looser tolerance.
    out_bf16 = jax.block_until_ready(head_forward(x, wk, wq, wv))
    assert out_bf16.shape == (B, T, head_size)
    assert jnp.allclose(out_bf16, ref, atol=5e-2, rtol=5e-2), "bf16 path mismatch vs reference"

    print("KERNEL_OK")
</pallas_src>

<mosaic_0001>
module attributes {stable_mosaic.version = 11 : i64} {
  func.func @_head_kernel(%arg0: i32, %arg1: memref<2x16x256xf32, #tpu.memory_space<vmem>>, %arg2: memref<256x96xf32, #tpu.memory_space<vmem>>, %arg3: memref<2x16x32xf32, #tpu.memory_space<vmem>>) attributes {dimension_semantics = [#tpu.dimension_semantics<parallel>], iteration_bounds = array<i64: 1>, scalar_prefetch = 0 : i64, scratch_operands = 0 : i64, tpu.core_type = #tpu.core_type<tc>, window_params = [{transform_indices = @transform_0, window_bounds = array<i64: 2, 16, 256>}, {pipeline_mode = #tpu.pipeline_mode<synchronous>, transform_indices = @transform_1, window_bounds = array<i64: 256, 96>}, {transform_indices = @transform_2, window_bounds = array<i64: 2, 16, 32>}]} {
    %c0 = arith.constant 0 : index
    %c0_0 = arith.constant 0 : index
    %c0_1 = arith.constant 0 : index
    %0 = vector.load %arg1[%c0, %c0_0, %c0_1] : memref<2x16x256xf32, #tpu.memory_space<vmem>>, vector<2x16x256xf32>
    %1 = vector.shape_cast %0 : vector<2x16x256xf32> to vector<32x256xf32>
    %c0_2 = arith.constant 0 : index
    %c0_3 = arith.constant 0 : index
    %2 = vector.load %arg2[%c0_2, %c0_3] : memref<256x96xf32, #tpu.memory_space<vmem>>, vector<256x96xf32>
    %cst = arith.constant dense<0.000000e+00> : vector<32x96xf32>
    %3 = tpu.matmul %1, %2, %cst {dimension_numbers = #tpu.dot_dimension_numbers<[1], [0], [0], [1], [0, 0, 1, 1], [], []>} : vector<32x256xf32>, vector<256x96xf32>, vector<32x96xf32> -> vector<32x96xf32>
    %4 = vector.shape_cast %3 : vector<32x96xf32> to vector<2x16x96xf32>
    %5 = vector.extract_strided_slice %4 {offsets = [0, 0, 0], sizes = [2, 16, 32], strides = [1, 1, 1]} : vector<2x16x96xf32> to vector<2x16x32xf32>
    %6 = vector.extract_strided_slice %4 {offsets = [0, 0, 32], sizes = [2, 16, 32], strides = [1, 1, 1]} : vector<2x16x96xf32> to vector<2x16x32xf32>
    %7 = vector.extract_strided_slice %4 {offsets = [0, 0, 64], sizes = [2, 16, 32], strides = [1, 1, 1]} : vector<2x16x96xf32> to vector<2x16x32xf32>
    "tpu.trace_start"() <{level = 10 : i32, message = "btd,bsd->bts"}> : () -> ()
    %cst_4 = arith.constant dense<0.000000e+00> : vector<2x16x16xf32>
    %8 = tpu.matmul %5, %6, %cst_4 {dimension_numbers = #tpu.dot_dimension_numbers<[2], [2], [1], [1], [0, 0, 0, 1, 1, 1], [0], [0]>} : vector<2x16x32xf32>, vector<2x16x32xf32>, vector<2x16x16xf32> -> vector<2x16x16xf32>
    "tpu.trace_stop"() : () -> ()
    %9 = tpu.iota {dimensions = array<i32: 0>} : vector<16x16xi32>
    %10 = tpu.iota {dimensions = array<i32: 1>} : vector<16x16xi32>
    %11 = arith.cmpi sle, %10, %9 : vector<16x16xi32>
    %12 = vector.shape_cast %11 : vector<16x16xi1> to vector<1x16x16xi1>
    %cst_5 = arith.constant -1.000000e+30 : f32
    %13 = vector.shape_cast %12 : vector<1x16x16xi1> to vector<1x16x16xi1>
    %14 = vector.broadcast %13 : vector<1x16x16xi1> to vector<2x16x16xi1>
    %15 = vector.broadcast %cst_5 : f32 to vector<2x16x16xf32>
    %16 = arith.select %14, %8, %15 : vector<2x16x16xi1>, vector<2x16x16xf32>
    %cst_6 = arith.constant dense<0xFF800000> : vector<2x16xf32>
    %17 = vector.multi_reduction <maximumf>, %16, %cst_6 [2] : vector<2x16x16xf32> to vector<2x16xf32>
    %18 = vector.shape_cast %17 : vector<2x16xf32> to vector<2x16x1xf32>
    %19 = vector.broadcast %18 : vector<2x16x1xf32> to vector<2x16x16xf32>
    %20 = arith.subf %16, %19 : vector<2x16x16xf32>
    %21 = math.exp %20 : vector<2x16x16xf32>
    %cst_7 = arith.constant dense<0.000000e+00> : vector<2x16xf32>
    %22 = vector.multi_reduction <add>, %21, %cst_7 [2] : vector<2x16x16xf32> to vector<2x16xf32>
    %23 = vector.shape_cast %22 : vector<2x16xf32> to vector<2x16x1xf32>
    %24 = vector.broadcast %23 : vector<2x16x1xf32> to vector<2x16x16xf32>
    %25 = arith.divf %21, %24 : vector<2x16x16xf32>
    "tpu.trace_start"() <{level = 10 : i32, message = "bts,bsd->btd"}> : () -> ()
    %cst_8 = arith.constant dense<0.000000e+00> : vector<2x16x32xf32>
    %26 = tpu.matmul %25, %7, %cst_8 {dimension_numbers = #tpu.dot_dimension_numbers<[2], [1], [1], [2], [0, 0, 0, 1, 1, 2], [0], [0]>} : vector<2x16x16xf32>, vector<2x16x32xf32>, vector<2x16x32xf32> -> vector<2x16x32xf32>
    "tpu.trace_stop"() : () -> ()
    %c0_9 = arith.constant 0 : index
    %c0_10 = arith.constant 0 : index
    %c0_11 = arith.constant 0 : index
    %27 = vector.load %arg3[%c0_9, %c0_10, %c0_11] : memref<2x16x32xf32, #tpu.memory_space<vmem>>, vector<2x16x32xf32>
    tpu.vector_store %arg3[%c0_9, %c0_10, %c0_11], %26 {strides = array<i32>} : memref<2x16x32xf32, #tpu.memory_space<vmem>>, vector<2x16x32xf32>,
    return
  }
  func.func @transform_0(%arg0: i32) -> (i32, i32, i32) {
    %c0_i32 = arith.constant 0 : i32
    %c0_i32_0 = arith.constant 0 : i32
    %c0_i32_1 = arith.constant 0 : i32
    return %arg0, %c0_i32, %c0_i32_0 : i32, i32, i32
  }
  func.func @transform_1(%arg0: i32) -> (i32, i32) {
    %c0_i32 = arith.constant 0 : i32
    %c0_i32_0 = arith.constant 0 : i32
    %c0_i32_1 = arith.constant 0 : i32
    return %c0_i32, %c0_i32_0 : i32, i32
  }
  func.func @transform_2(%arg0: i32) -> (i32, i32, i32) {
    %c0_i32 = arith.constant 0 : i32
    %c0_i32_0 = arith.constant 0 : i32
    %c0_i32_1 = arith.constant 0 : i32
    return %arg0, %c0_i32, %c0_i32_0 : i32, i32, i32
  }
}

</mosaic_0001>

<llo_original>
// kernel: tpu_custom_call.1
$region0: #{tpu_custom_call.1}
  #allocation0 [shape = 'u32[]', space=smem, size = 0x4, offset = 0x4, fixed_abs, tag = 'smem constant byte address 0x4 - core index']
  #allocation1 [shape = 'u32[72,128]{1,0:T(1,128)}', space=vmem, size = 0x9000, scoped, tag = 'internal scratch']
  %s0 = inlined_call_operand.vmem [shape: f32[2,16,256], index: 0, kind: input, shape index: {}]
  %s1 = inlined_call_operand.vmem [shape: f32[256,96], index: 1, kind: input, shape index: {}]
  %s2 = inlined_call_operand.hbm [shape: f32[2,16,32], index: 2, kind: output, shape index: {}]
  %s3 = sld [smem:[#allocation0]]
  $region18: #{tpu_custom_call.1} parent=0
    _
  %s5 = ssub.s32 1, %s3
  %s6 = scalar_select 0, %s5, %s3
  $region1: #{tpu_custom_call.1} parent=0
    #allocation2 [shape = 'u8[16384]{0}', space=vmem, size = 0x4000, scoped, tag = 'output window, operand 0, single buffered']
    #allocation3 [shape = 's32[1]{0}', space=sflag, size = 0x4, scoped, tag = 'scoped memory for tpu_custom_call.1']
    %7 = vsyncpa [#allocation3], 0
    // Predicated region
    $region2: #{tpu_custom_call.1} parent=1 // pred_check
      _
    $region3: #{tpu_custom_call.1} parent=1 // pred_check_branch
      %9 = sbr.rel (0) target = $region5
    $region4: #{tpu_custom_call.1} parent=1 // pred_region
      _
    $region5: #{tpu_custom_call.1} parent=1 // pred_fallthru
      _
    // Predicated region
    $region6: #{tpu_custom_call.1} parent=1 // pred_check
      _
    $region7: #{tpu_custom_call.1} parent=1 // pred_check_branch
      %11 = sbr.rel (0) target = $region9
    $region8: #{tpu_custom_call.1} parent=1 // pred_region
      _
    $region9: #{tpu_custom_call.1} parent=1 // pred_fallthru
      _
    %v12 = vld [vmem:[%s0] sm:$0xff]
    %v13 = vld [vmem:[%s0 + $0x8] sm:$0xff]
    %v14 = vld [vmem:[%s0 + $0x10] sm:$0xff]
    %v15 = vld [vmem:[%s0 + $0x18] sm:$0xff]
    %v16 = vld [vmem:[%s0 + $0x20] sm:$0xff]
    %v17 = vld [vmem:[%s0 + $0x28] sm:$0xff]
    %v18 = vld [vmem:[%s0 + $0x30] sm:$0xff]
    %v19 = vld [vmem:[%s0 + $0x38] sm:$0xff]
    %v20 = vld [vmem:[%s1] sm:$0xff]
    %v21 = vld [vmem:[%s1 + $0x8] sm:$0xff]
    %v22 = vld [vmem:[%s1 + $0x10] sm:$0xff]
    %v23 = vld [vmem:[%s1 + $0x18] sm:$0xff]
    %v24 = vld [vmem:[%s1 + $0x20] sm:$0xff]
    %v25 = vld [vmem:[%s1 + $0x28] sm:$0xff]
    %v26 = vld [vmem:[%s1 + $0x30] sm:$0xff]
    %v27 = vld [vmem:[%s1 + $0x38] sm:$0xff]
    %v28 = vld [vmem:[%s1 + $0x40] sm:$0xff]
    %v29 = vld [vmem:[%s1 + $0x48] sm:$0xff]
    %v30 = vld [vmem:[%s1 + $0x50] sm:$0xff]
    %v31 = vld [vmem:[%s1 + $0x58] sm:$0xff]
    %v32 = vld [vmem:[%s1 + $0x60] sm:$0xff]
    %v33 = vld [vmem:[%s1 + $0x68] sm:$0xff]
    %v34 = vld [vmem:[%s1 + $0x70] sm:$0xff]
    %v35 = vld [vmem:[%s1 + $0x78] sm:$0xff]
    %v36 = vld [vmem:[%s1 + $0x80] sm:$0xff]
    %v37 = vld [vmem:[%s1 + $0x88] sm:$0xff]
    %v38 = vld [vmem:[%s1 + $0x90] sm:$0xff]
    %v39 = vld [vmem:[%s1 + $0x98] sm:$0xff]
    %v40 = vld [vmem:[%s1 + $0xa0] sm:$0xff]
    %v41 = vld [vmem:[%s1 + $0xa8] sm:$0xff]
    %v42 = vld [vmem:[%s1 + $0xb0] sm:$0xff]
    %v43 = vld [vmem:[%s1 + $0xb8] sm:$0xff]
    %v44 = vld [vmem:[%s1 + $0xc0] sm:$0xff]
    %v45 = vld [vmem:[%s1 + $0xc8] sm:$0xff]
    %v46 = vld [vmem:[%s1 + $0xd0] sm:$0xff]
    %v47 = vld [vmem:[%s1 + $0xd8] sm:$0xff]
    %v48 = vld [vmem:[%s1 + $0xe0] sm:$0xff]
    %v49 = vld [vmem:[%s1 + $0xe8] sm:$0xff]
    %v50 = vld [vmem:[%s1 + $0xf0] sm:$0xff]
    %v51 = vld [vmem:[%s1 + $0xf8] sm:$0xff]
    %52 = vmatpush.msra.mxu0 %v35
    %53 = vmatpush.msra.mxu0 %v34
    %54 = vmatpush.msra.mxu0 %v33
    %55 = vmatpush.msra.mxu0 %v32
    %56 = vmatpush.msra.mxu0 %v31
    %57 = vmatpush.msra.mxu0 %v30
    %58 = vmatpush.msra.mxu0 %v29
    %59 = vmatpush.msra.mxu0 %v28
    %60 = vmatpush.msra.mxu0 %v27
    %61 = vmatpush.msra.mxu0 %v26
    %62 = vmatpush.msra.mxu0 %v25
    %63 = vmatpush.msra.mxu0 %v24
    %64 = vmatpush.msra.mxu0 %v23
    %65 = vmatpush.msra.mxu0 %v22
    %66 = vmatpush.msra.mxu0 %v21
    %67 = vmatpush.msra.mxu0 %v20
    %68 = vmatmul.f32.gmra.mxu0 %v12
    %v69 = vpop.f32.mrf.mxu0
    %v70 = vadd.f32 0.0, %v69
    %71 = vmatmul.f32.gmra.mxu0 %v14
    %v72 = vpop.f32.mrf.mxu0
    %v73 = vadd.f32 0.0, %v72
    %74 = vmatmul.f32.gmra.mxu0 %v16
    %v75 = vpop.f32.mrf.mxu0
    %v76 = vadd.f32 0.0, %v75
    %77 = vmatmul.f32.gmra.mxu0 %v18
    %v78 = vpop.f32.mrf.mxu0
    %v79 = vadd.f32 0.0, %v78
    %80 = vdwg.mxu0
    %81 = vmatpush.msra.mxu0 %v51
    %82 = vmatpush.msra.mxu0 %v50
    %83 = vmatpush.msra.mxu0 %v49
    %84 = vmatpush.msra.mxu0 %v48
    %85 = vmatpush.msra.mxu0 %v47
    %86 = vmatpush.msra.mxu0 %v46
    %87 = vmatpush.msra.mxu0 %v45
    %88 = vmatpush.msra.mxu0 %v44
    %89 = vmatpush.msra.mxu0 %v43
    %90 = vmatpush.msra.mxu0 %v42
    %91 = vmatpush.msra.mxu0 %v41
    %92 = vmatpush.msra.mxu0 %v40
    %93 = vmatpush.msra.mxu0 %v39
    %94 = vmatpush.msra.mxu0 %v38
    %95 = vmatpush.msra.mxu0 %v37
    %96 = vmatpush.msra.mxu0 %v36
    %97 = vmatmul.f32.gmra.mxu0 %v13
    %v98 = vpop.f32.mrf.mxu0
    %v99 = vadd.f32 %v70, %v98
    %100 = vmatmul.f32.gmra.mxu0 %v15
    %v101 = vpop.f32.mrf.mxu0
    %v102 = vadd.f32 %v73, %v101
    %103 = vmatmul.f32.gmra.mxu0 %v17
    %v104 = vpop.f32.mrf.mxu0
    %v105 = vadd.f32 %v76, %v104
    %106 = vmatmul.f32.gmra.mxu0 %v19
    %v107 = vpop.f32.mrf.mxu0
    %v108 = vadd.f32 %v79, %v107
    %109 = vdwg.mxu0
    %112 = vrot.lane.b32.xlu0 %v99, 96
    %v113 = vpop.permute.xlu0 %112
    %114 = vrot.lane.b32.xlu0 %v102, 96
    %v115 = vpop.permute.xlu0 %114
    %vm116 = vcmask 261120
    %v117 = vsel %vm116, %v99, 0
    %v119 = vsel %vm116, %v102, 0
    %v121 = vsel %vm116, %v113, 0
    %v123 = vsel %vm116, %v115, 0
    %125 = vmatpush.xpose.msra.mxu0 0.0
    %126 = vmatpush.xpose.msra.mxu0 0.0
    %127 = vmatpush.xpose.msra.mxu0 0.0
    %128 = vmatpush.xpose.msra.mxu0 0.0
    %129 = vmatpush.xpose.msra.mxu0 0.0
    %130 = vmatpush.xpose.msra.mxu0 0.0
    %131 = vmatpush.xpose.msra.mxu0 0.0
    %132 = vmatpush.xpose.msra.mxu0 0.0
    %133 = vmatpush.xpose.msra.mxu0 0.0
    %134 = vmatpush.xpose.msra.mxu0 0.0
    %135 = vmatpush.xpose.msra.mxu0 0.0
    %136 = vmatpush.xpose.msra.mxu0 0.0
    %137 = vmatpush.xpose.msra.mxu0 0.0
    %138 = vmatpush.xpose.msra.mxu0 0.0
    %139 = vmatpush.xpose.msra.mxu0 %v123
    %140 = vmatpush.xpose.msra.mxu0 %v121
    %141 = vmatmul.f32.gmra.mxu0 %v117
    %v142 = vpop.f32.mrf.mxu0
    %v143 = vadd.f32 0.0, %v142
    %144 = vmatmul.f32.gmra.mxu0 %v119
    %v145 = vpop.f32.mrf.mxu0
    %v146 = vadd.f32 0.0, %v145
    %147 = vdwg.mxu0
    %150 = vrot.lane.b32.xlu0 %v105, 96
    %v151 = vpop.permute.xlu0 %150
    %152 = vrot.lane.b32.xlu0 %v108, 96
    %v153 = vpop.permute.xlu0 %152
    %v154 = vsel %vm116, %v105, 0
    %v156 = vsel %vm116, %v108, 0
    %v158 = vsel %vm116, %v151, 0
    %v160 = vsel %vm116, %v153, 0
    %162 = vmatpush.xpose.msra.mxu0 0.0
    %163 = vmatpush.xpose.msra.mxu0 0.0
    %164 = vmatpush.xpose.msra.mxu0 0.0
    %165 = vmatpush.xpose.msra.mxu0 0.0
    %166 = vmatpush.xpose.msra.mxu0 0.0
    %167 = vmatpush.xpose.msra.mxu0 0.0
    %168 = vmatpush.xpose.msra.mxu0 0.0
    %169 = vmatpush.xpose.msra.mxu0 0.0
    %170 = vmatpush.xpose.msra.mxu0 0.0
    %171 = vmatpush.xpose.msra.mxu0 0.0
    %172 = vmatpush.xpose.msra.mxu0 0.0
    %173 = vmatpush.xpose.msra.mxu0 0.0
    %174 = vmatpush.xpose.msra.mxu0 0.0
    %175 = vmatpush.xpose.msra.mxu0 0.0
    %176 = vmatpush.xpose.msra.mxu0 %v160
    %177 = vmatpush.xpose.msra.mxu0 %v158
    %178 = vmatmul.f32.gmra.mxu0 %v154
    %v179 = vpop.f32.mrf.mxu0
    %v180 = vadd.f32 0.0, %v179
    %181 = vmatmul.f32.gmra.mxu0 %v156
    %v182 = vpop.f32.mrf.mxu0
    %v183 = vadd.f32 0.0, %v182
    %184 = vdwg.mxu0
    %v185 = vlaneseq
    %v186 = vshrl.u32 %v185, 7
    %v187 = vadd.s32 %v186, 8
    %v188 = vlaneseq
    %v189 = vand.u32 %v188, 127
    %vm190 = vcmp.le.s32.totalorder %v189, %v186
    %vm191 = vcmp.le.s32.totalorder %v189, %v187
    %v192 = vsel %vm190, 1, 0
    %v193 = vsel %vm191, 1, 0
    %vm194 = vcmp.eq.s32.totalorder %v192, 1
    %vm195 = vcmp.eq.s32.totalorder %v193, 1
    %v196 = vsel %vm194, %v143, -1e+30
    %v197 = vsel %vm195, %v146, -1e+30
    %v198 = vsel %vm194, %v180, -1e+30
    %v199 = vsel %vm195, %v183, -1e+30
    %vm200 = vcmask 130048
    %v201 = vsel %vm200, %v196, -inf
    %202 = vmax.xlane.f32.xlu0 %v201
    %v203 = vpop.xlane.xlu0 %202
    %v204 = vsel %vm200, %v197, -inf
    %205 = vmax.xlane.f32.xlu0 %v204
    %v206 = vpop.xlane.xlu0 %205
    %v207 = vsel %vm200, %v198, -inf
    %208 = vmax.xlane.f32.xlu0 %v207
    %v209 = vpop.xlane.xlu0 %208
    %v210 = vsel %vm200, %v199, -inf
    %211 = vmax.xlane.f32.xlu0 %v210
    %v212 = vpop.xlane.xlu0 %211
    %v213 = vsub.f32 %v196, %v203
    %v214 = vsub.f32 %v197, %v206
    %v215 = vsub.f32 %v198, %v209
    %v216 = vsub.f32 %v199, %v212
    %v217 = vmul.f32 %v213, 1.442695
    %v218 = vpow.pop %v217
    %v219 = vmul.f32 %v214, 1.442695
    %v220 = vpow.pop %v219
    %v221 = vmul.f32 %v215, 1.442695
    %v222 = vpow.pop %v221
    %v223 = vmul.f32 %v216, 1.442695
    %v224 = vpow.pop %v223
    %v225 = vsel %vm200, %v218, 0.0
    %226 = vadd.xlane.f32.xlu0 %v225
    %v227 = vpop.xlane.xlu0 %226
    %v228 = vsel %vm200, %v220, 0.0
    %229 = vadd.xlane.f32.xlu0 %v228
    %v230 = vpop.xlane.xlu0 %229
    %v231 = vsel %vm200, %v222, 0.0
    %232 = vadd.xlane.f32.xlu0 %v231
    %v233 = vpop.xlane.xlu0 %232
    %v234 = vsel %vm200, %v224, 0.0
    %235 = vadd.xlane.f32.xlu0 %v234
    %v236 = vpop.xlane.xlu0 %235
    %v237 = vrcp.pop %v227
    %v238 = vmul.f32 %v227, %v237
    %v239 = vsub.f32 1.0, %v238
    %v240 = vmul.f32 %v237, %v239
    %v241 = vadd.f32 %v237, %v240
    %vm242 = vweird.f32 %v227
    %vm243 = vweird.f32 %v237
    %vm244 = vmor %vm242, %vm243
    %v245 = vsel %vm244, %v237, %v241
    %v246 = vand.u32 2147483647, %v227
    %vm247 = vcmp.eq.f32.partialorder %v246, 8.507059e+37
    %v248 = vand.u32 %v227, 2147483648
    %v249 = vor.u32 1.1754944e-38, %v248
    %v250 = vsel %vm247, %v249, %v245
    %v251 = vmul.f32 %v218, %v250
    %v252 = vrcp.pop %v230
    %v253 = vmul.f32 %v230, %v252
    %v254 = vsub.f32 1.0, %v253
    %v255 = vmul.f32 %v252, %v254
    %v256 = vadd.f32 %v252, %v255
    %vm257 = vweird.f32 %v230
    %vm258 = vweird.f32 %v252
    %vm259 = vmor %vm257, %vm258
    %v260 = vsel %vm259, %v252, %v256
    %v261 = vand.u32 2147483647, %v230
    %vm262 = vcmp.eq.f32.partialorder %v261, 8.507059e+37
    %v263 = vand.u32 %v230, 2147483648
    %v264 = vor.u32 1.1754944e-38, %v263
    %v265 = vsel %vm262, %v264, %v260
    %v266 = vmul.f32 %v220, %v265
    %v267 = vrcp.pop %v233
    %v268 = vmul.f32 %v233, %v267
    %v269 = vsub.f32 1.0, %v268
    %v270 = vmul.f32 %v267, %v269
    %v271 = vadd.f32 %v267, %v270
    %vm272 = vweird.f32 %v233
    %vm273 = vweird.f32 %v267
    %vm274 = vmor %vm272, %vm273
    %v275 = vsel %vm274, %v267, %v271
    %v276 = vand.u32 2147483647, %v233
    %vm277 = vcmp.eq.f32.partialorder %v276, 8.507059e+37
    %v278 = vand.u32 %v233, 2147483648
    %v279 = vor.u32 1.1754944e-38, %v278
    %v280 = vsel %vm277, %v279, %v275
    %v281 = vmul.f32 %v222, %v280
    %v282 = vrcp.pop %v236
    %v283 = vmul.f32 %v236, %v282
    %v284 = vsub.f32 1.0, %v283
    %v285 = vmul.f32 %v282, %v284
    %v286 = vadd.f32 %v282, %v285
    %vm287 = vweird.f32 %v236
    %vm288 = vweird.f32 %v282
    %vm289 = vmor %vm287, %vm288
    %v290 = vsel %vm289, %v282, %v286
    %v291 = vand.u32 2147483647, %v236
    %vm292 = vcmp.eq.f32.partialorder %v291, 8.507059e+37
    %v293 = vand.u32 %v236, 2147483648
    %v294 = vor.u32 1.1754944e-38, %v293
    %v295 = vsel %vm292, %v294, %v290
    %v296 = vmul.f32 %v224, %v295
    %297 = vrot.lane.b32.xlu0 %v99, 64
    %v298 = vpop.permute.xlu0 %297
    %299 = vrot.lane.b32.xlu0 %v102, 64
    %v300 = vpop.permute.xlu0 %299
    %v304 = vsel %vm200, %v251, 0
    %v307 = vsel %vm200, %v266, 0
    %309 = vmatpush.msra.mxu0 0.0
    %310 = vmatpush.msra.mxu0 0.0
    %311 = vmatpush.msra.mxu0 0.0
    %312 = vmatpush.msra.mxu0 0.0
    %313 = vmatpush.msra.mxu0 0.0
    %314 = vmatpush.msra.mxu0 0.0
    %315 = vmatpush.msra.mxu0 0.0
    %316 = vmatpush.msra.mxu0 0.0
    %317 = vmatpush.msra.mxu0 0.0
    %318 = vmatpush.msra.mxu0 0.0
    %319 = vmatpush.msra.mxu0 0.0
    %320 = vmatpush.msra.mxu0 0.0
    %321 = vmatpush.msra.mxu0 0.0
    %322 = vmatpush.msra.mxu0 0.0
    %323 = vmatpush.msra.mxu0 %v300
    %324 = vmatpush.msra.mxu0 %v298
    %325 = vmatmul.f32.gmra.mxu0 %v304
    %v326 = vpop.f32.mrf.mxu0
    %v327 = vadd.f32 0.0, %v326
    %328 = vmatmul.f32.gmra.mxu0 %v307
    %v329 = vpop.f32.mrf.mxu0
    %v330 = vadd.f32 0.0, %v329
    %331 = vdwg.mxu0
    %332 = vrot.lane.b32.xlu0 %v105, 64
    %v333 = vpop.permute.xlu0 %332
    %334 = vrot.lane.b32.xlu0 %v108, 64
    %v335 = vpop.permute.xlu0 %334
    %v339 = vsel %vm200, %v281, 0
    %v342 = vsel %vm200, %v296, 0
    %344 = vmatpush.msra.mxu0 0.0
    %345 = vmatpush.msra.mxu0 0.0
    %346 = vmatpush.msra.mxu0 0.0
    %347 = vmatpush.msra.mxu0 0.0
    %348 = vmatpush.msra.mxu0 0.0
    %349 = vmatpush.msra.mxu0 0.0
    %350 = vmatpush.msra.mxu0 0.0
    %351 = vmatpush.msra.mxu0 0.0
    %352 = vmatpush.msra.mxu0 0.0
    %353 = vmatpush.msra.mxu0 0.0
    %354 = vmatpush.msra.mxu0 0.0
    %355 = vmatpush.msra.mxu0 0.0
    %356 = vmatpush.msra.mxu0 0.0
    %357 = vmatpush.msra.mxu0 0.0
    %358 = vmatpush.msra.mxu0 %v335
    %359 = vmatpush.msra.mxu0 %v333
    %360 = vmatmul.f32.gmra.mxu0 %v339
    %v361 = vpop.f32.mrf.mxu0
    %v362 = vadd.f32 0.0, %v361
    %363 = vmatmul.f32.gmra.mxu0 %v342
    %v364 = vpop.f32.mrf.mxu0
    %v365 = vadd.f32 0.0, %v364
    %366 = vdwg.mxu0
    %367 = vst.msk [vmem:[#allocation2] sm:$0xff] %vm116, %v327
    %368 = vst.msk [vmem:[#allocation2 + $0x8] sm:$0xff] %vm116, %v330
    %369 = vst.msk [vmem:[#allocation2 + $0x10] sm:$0xff] %vm116, %v362
    %370 = vst.msk [vmem:[#allocation2 + $0x18] sm:$0xff] %vm116, %v365
    // Predicated region
    $region10: #{tpu_custom_call.1} parent=1 // pred_check
      _
    $region11: #{tpu_custom_call.1} parent=1 // pred_check_branch
      %372 = sbr.rel (0) target = $region13
    $region12: #{tpu_custom_call.1} parent=1 // pred_region
      %374 = vsyncadd [#allocation3], 0
      %s375 = sshll.u32 [#allocation2], 4
      %s376 = int_to_ptr.vmem [resolvable:$true] %s375
      %s377 = sshll.u32 %s2, 4
      %s378 = int_to_ptr.hbm [resolvable:$true] %s377
      %383 = dma.vmem_to_hbm [thread:$0]  %s376, 512, %s378, [#allocation3], 128, 128, 8
    $region13: #{tpu_custom_call.1} parent=1 // pred_fallthru
      _
    // Predicated region
    $region14: #{tpu_custom_call.1} parent=1 // pred_check
      _
    $region15: #{tpu_custom_call.1} parent=1 // pred_check_branch
      %385 = sbr.rel (0) target = $region17
    $region16: #{tpu_custom_call.1} parent=1 // pred_region
      %387 = dma.done [#allocation3], 512
    $region17: #{tpu_custom_call.1} parent=1 // pred_fallthru
      _
    %388 = vsyncpa [#allocation3], 1

</llo_original>
